<compile_context>
chip_gen: v7x
topology: tpu7x:2x2x1
jax: 0.10.0
libtpu: 0.0.40
codegen_flags: <defaults>
</compile_context>

<pallas_src>
import jax
import jax.numpy as jnp
from jax.experimental import pallas as pl
from jax.experimental.pallas import tpu as pltpu


def _loreft_kernel(base_ref, img_ref, w12t_ref, b12_ref, m1_ref, m2_ref, c_ref,
                   out_ref):
    f32 = jnp.float32
    base = base_ref[...].astype(f32)                                       # (T, D)
    img = img_ref[...].astype(f32)                                         # (B, C)
    T, D = base.shape
    B = img.shape[0]

    # ---- fused (collapsed) image-feature MLP: one GEMM, linear activation ----
    pimg = jnp.dot(img, w12t_ref[...], preferred_element_type=f32) + b12_ref[...]  # (B, D)

    # ---- batch-invariant part, fully folded: base + base @ M1 + c ----
    base_resid = (base
                  + jnp.dot(base, m1_ref[...], preferred_element_type=f32)
                  + c_ref[...])                                            # (T, D)

    # ---- batched part, folded to one matmul; flattened to (B*T, D) for MXU
    #      row fill (T is a multiple of 8 => reshape is a free relayout) ----
    rd = (pimg[:, None, :] * base[None, :, :]).reshape(B * T, D)           # (B*T, D)
    delta = jnp.dot(rd, m2_ref[...], preferred_element_type=f32)           # (B*T, D)

    out = base_resid[None, :, :] + delta.reshape(B, T, D)                  # (B, T, D)
    out_ref[...] = out.astype(out_ref.dtype)


def prepare_params(params):
    """One-time weight folding / transposition (do NOT run per forward call)."""
    f32 = jnp.float32
    wr = params["wr"].astype(f32)                   # (D, r)
    ws = params["ws"].astype(f32)                   # (r, 2D)
    bs = params["bs"].astype(f32)                   # (r,)
    w1 = params["w1"].astype(f32)                   # (r, C)
    b1 = params["b1"].astype(f32)                   # (r,)
    w2 = params["w2"].astype(f32)                   # (D, r)
    b2 = params["b2"].astype(f32)                   # (D,)
    D = wr.shape[0]
    wr_t = wr.T                                     # (r, D)

    # Batch-invariant fold: base + (base@Ws_a^T + bs - base@Wr) @ Wr^T
    #                      = base + base @ M1 + c
    m1 = (ws[:, :D].T - wr) @ wr_t                  # (D, D)
    c = (bs @ wr_t).reshape(1, D)                   # (1, D)

    # Batched fold: (rd @ Ws_b^T) @ Wr^T = rd @ M2
    m2 = ws[:, D:].T @ wr_t                         # (D, D)

    # Collapsed image MLP (linear activation): pimg = img @ W12^T + b12
    w12_t = w1.T @ w2.T                             # (C, D)
    b12 = (w2 @ b1 + b2).reshape(1, D)              # (1, D)

    return dict(w12_t=w12_t, b12=b12, m1=m1, m2=m2, c=c)


def conditional_loreft_forward(base, img_feature, prepared):
    T, D = base.shape
    B, C = img_feature.shape

    # Rough cost hint: image GEMM + base-resid GEMM + batched GEMM.
    flops = 2 * B * C * D + 2 * T * D * D + 2 * B * T * D * D
    bytes_accessed = 4 * (B * T * D + T * D + B * C + 2 * D * D + C * D + 3 * D)
    cost = pl.CostEstimate(flops=flops, transcendentals=0,
                           bytes_accessed=bytes_accessed)

    vmem = pl.BlockSpec(memory_space=pltpu.MemorySpace.VMEM)
    return pl.pallas_call(
        _loreft_kernel,
        out_shape=jax.ShapeDtypeStruct((B, T, D), base.dtype),
        in_specs=[vmem] * 7,
        out_specs=vmem,
        cost_estimate=cost,
    )(base, img_feature, prepared["w12_t"], prepared["b12"],
      prepared["m1"], prepared["m2"], prepared["c"])


def reference_forward(base, img_feature, params):
    """Pure-JAX mirror of the PyTorch forward (eval mode)."""
    base_org = base.astype(jnp.float32)
    pimg = img_feature.astype(jnp.float32) @ params["w1"].T + params["b1"]
    pimg = pimg @ params["w2"].T + params["b2"]
    rd = pimg[:, None, :] * base_org[None, :, :]
    B = rd.shape[0]
    base2 = jnp.concatenate(
        [jnp.broadcast_to(base_org[None], (B,) + base_org.shape), rd], axis=-1)
    shifted = base2 @ params["ws"].T + params["bs"]
    rot = base_org @ params["wr"]
    out = base_org[None] + (shifted - rot[None]) @ params["wr"].T
    return out.astype(base.dtype)


if __name__ == "__main__":
    # Small shapes consistent with the module:
    embed_dim = 128          # D
    low_rank_dimension = 16  # r
    ctx_dim = 64             # C
    n_cls = 8                # number of base tokens T (multiple of 8 -> reshape is free)
    batch = 2                # number of image features B

    key = jax.random.PRNGKey(0)
    k = jax.random.split(key, 9)

    # Deterministic parameter init (shapes from the module's __init__).
    wr = jnp.linalg.qr(jax.random.normal(k[0], (embed_dim, low_rank_dimension),
                                         jnp.float32))[0]            # orthogonal (D, r)
    ws = jax.random.normal(k[1], (low_rank_dimension, 2 * embed_dim),
                           jnp.float32) * 0.02                        # learned_source.weight
    bs = jax.random.normal(k[2], (low_rank_dimension,), jnp.float32) * 0.02
    w1 = jax.random.normal(k[3], (low_rank_dimension, ctx_dim), jnp.float32) * 0.05
    b1 = jax.random.normal(k[4], (low_rank_dimension,), jnp.float32) * 0.05
    w2 = jax.random.normal(k[5], (embed_dim, low_rank_dimension), jnp.float32) * 0.05
    b2 = jax.random.normal(k[6], (embed_dim,), jnp.float32) * 0.05
    params = dict(wr=wr, ws=ws, bs=bs, w1=w1, b1=b1, w2=w2, b2=b2)

    base = jax.random.normal(k[7], (n_cls, embed_dim), jnp.float32)
    img_feature = jax.random.normal(k[8], (batch, ctx_dim), jnp.float32)

    # One-time weight folding, then a single pallas_call per forward.
    prepared = jax.tree_util.tree_map(jax.block_until_ready, prepare_params(params))

    out = conditional_loreft_forward(base, img_feature, prepared)
    out = jax.block_until_ready(out)

    ref = reference_forward(base, img_feature, params)
    assert out.shape == (batch, n_cls, embed_dim)
    assert jnp.allclose(out, ref, atol=1e-4, rtol=1e-4), "mismatch vs reference"

    print("KERNEL_OK")
</pallas_src>

<mosaic_0001>
module attributes {stable_mosaic.version = 11 : i64} {
  func.func @_loreft_kernel(%arg0: memref<8x128xf32, #tpu.memory_space<vmem>>, %arg1: memref<2x64xf32, #tpu.memory_space<vmem>>, %arg2: memref<64x128xf32, #tpu.memory_space<vmem>>, %arg3: memref<1x128xf32, #tpu.memory_space<vmem>>, %arg4: memref<128x128xf32, #tpu.memory_space<vmem>>, %arg5: memref<128x128xf32, #tpu.memory_space<vmem>>, %arg6: memref<1x128xf32, #tpu.memory_space<vmem>>, %arg7: memref<2x8x128xf32, #tpu.memory_space<vmem>>) attributes {dimension_semantics = [], scalar_prefetch = 0 : i64, scratch_operands = 0 : i64, tpu.core_type = #tpu.core_type<tc>} {
    %c0 = arith.constant 0 : index
    %c0_0 = arith.constant 0 : index
    %0 = vector.load %arg0[%c0, %c0_0] : memref<8x128xf32, #tpu.memory_space<vmem>>, vector<8x128xf32>
    %c0_1 = arith.constant 0 : index
    %c0_2 = arith.constant 0 : index
    %1 = vector.load %arg1[%c0_1, %c0_2] : memref<2x64xf32, #tpu.memory_space<vmem>>, vector<2x64xf32>
    %c0_3 = arith.constant 0 : index
    %c0_4 = arith.constant 0 : index
    %2 = vector.load %arg2[%c0_3, %c0_4] : memref<64x128xf32, #tpu.memory_space<vmem>>, vector<64x128xf32>
    %cst = arith.constant dense<0.000000e+00> : vector<2x128xf32>
    %3 = tpu.matmul %1, %2, %cst {dimension_numbers = #tpu.dot_dimension_numbers<[1], [0], [0], [1], [0, 0, 1, 1], [], []>} : vector<2x64xf32>, vector<64x128xf32>, vector<2x128xf32> -> vector<2x128xf32>
    %c0_5 = arith.constant 0 : index
    %c0_6 = arith.constant 0 : index
    %4 = vector.load %arg3[%c0_5, %c0_6] : memref<1x128xf32, #tpu.memory_space<vmem>>, vector<1x128xf32>
    %5 = vector.broadcast %4 : vector<1x128xf32> to vector<2x128xf32>
    %6 = arith.addf %3, %5 : vector<2x128xf32>
    %c0_7 = arith.constant 0 : index
    %c0_8 = arith.constant 0 : index
    %7 = vector.load %arg4[%c0_7, %c0_8] : memref<128x128xf32, #tpu.memory_space<vmem>>, vector<128x128xf32>
    %cst_9 = arith.constant dense<0.000000e+00> : vector<8x128xf32>
    %8 = tpu.matmul %0, %7, %cst_9 {dimension_numbers = #tpu.dot_dimension_numbers<[1], [0], [0], [1], [0, 0, 1, 1], [], []>} : vector<8x128xf32>, vector<128x128xf32>, vector<8x128xf32> -> vector<8x128xf32>
    %9 = arith.addf %0, %8 : vector<8x128xf32>
    %c0_10 = arith.constant 0 : index
    %c0_11 = arith.constant 0 : index
    %10 = vector.load %arg6[%c0_10, %c0_11] : memref<1x128xf32, #tpu.memory_space<vmem>>, vector<1x128xf32>
    %11 = vector.broadcast %10 : vector<1x128xf32> to vector<8x128xf32>
    %12 = arith.addf %9, %11 : vector<8x128xf32>
    %13 = vector.shape_cast %6 : vector<2x128xf32> to vector<2x1x128xf32>
    %14 = vector.shape_cast %0 : vector<8x128xf32> to vector<1x8x128xf32>
    %15 = vector.broadcast %13 : vector<2x1x128xf32> to vector<2x8x128xf32>
    %16 = vector.broadcast %14 : vector<1x8x128xf32> to vector<2x8x128xf32>
    %17 = arith.mulf %15, %16 : vector<2x8x128xf32>
    %18 = vector.shape_cast %17 : vector<2x8x128xf32> to vector<16x128xf32>
    %c0_12 = arith.constant 0 : index
    %c0_13 = arith.constant 0 : index
    %19 = vector.load %arg5[%c0_12, %c0_13] : memref<128x128xf32, #tpu.memory_space<vmem>>, vector<128x128xf32>
    %cst_14 = arith.constant dense<0.000000e+00> : vector<16x128xf32>
    %20 = tpu.matmul %18, %19, %cst_14 {dimension_numbers = #tpu.dot_dimension_numbers<[1], [0], [0], [1], [0, 0, 1, 1], [], []>} : vector<16x128xf32>, vector<128x128xf32>, vector<16x128xf32> -> vector<16x128xf32>
    %21 = vector.shape_cast %12 : vector<8x128xf32> to vector<1x8x128xf32>
    %22 = vector.shape_cast %20 : vector<16x128xf32> to vector<2x8x128xf32>
    %23 = vector.broadcast %21 : vector<1x8x128xf32> to vector<2x8x128xf32>
    %24 = arith.addf %23, %22 : vector<2x8x128xf32>
    %c0_15 = arith.constant 0 : index
    %c0_16 = arith.constant 0 : index
    %c0_17 = arith.constant 0 : index
    %25 = vector.load %arg7[%c0_15, %c0_16, %c0_17] : memref<2x8x128xf32, #tpu.memory_space<vmem>>, vector<2x8x128xf32>
    tpu.vector_store %arg7[%c0_15, %c0_16, %c0_17], %24 {strides = array<i32>} : memref<2x8x128xf32, #tpu.memory_space<vmem>>, vector<2x8x128xf32>,
    return
  }
}

</mosaic_0001>

<llo_original>
// kernel: tpu_custom_call.1
$region0: #{tpu_custom_call.1}
  #allocation0 [shape = 'u32[]', space=smem, size = 0x4, offset = 0x4, fixed_abs, tag = 'smem constant byte address 0x4 - core index']
  #allocation1 [shape = 'u32[144,128]{1,0:T(1,128)}', space=vmem, size = 0x12000, scoped, tag = 'internal scratch']
  %s0 = inlined_call_operand.hbm [shape: f32[8,128], index: 0, kind: input, shape index: {}]
  %s1 = inlined_call_operand.vmem [shape: f32[2,64], index: 1, kind: input, shape index: {}]
  %s2 = inlined_call_operand.hbm [shape: f32[64,128], index: 2, kind: input, shape index: {}]
  %s3 = inlined_call_operand.vmem [shape: f32[1,128], index: 3, kind: input, shape index: {}]
  %s4 = inlined_call_operand.hbm [shape: f32[128,128], index: 4, kind: input, shape index: {}]
  %s5 = inlined_call_operand.hbm [shape: f32[128,128], index: 5, kind: input, shape index: {}]
  %s6 = inlined_call_operand.vmem [shape: f32[1,128], index: 6, kind: input, shape index: {}]
  %s7 = inlined_call_operand.hbm [shape: f32[2,8,128], index: 7, kind: output, shape index: {}]
  %s8 = sld [smem:[#allocation0]]
  $region54: #{tpu_custom_call.1} parent=0
    _
  %s10 = ssub.s32 1, %s8
  %s11 = scalar_select 0, %s10, %s8
  $region1: #{tpu_custom_call.1} parent=0
    #allocation2 [shape = 'u8[4096]{0}', space=vmem, size = 0x1000, scoped, tag = 'input window, operand 0, single buffered']
    #allocation3 [shape = 's32[1]{0}', space=sflag, size = 0x4, scoped, tag = 'scoped memory for tpu_custom_call.1']
    #allocation4 [shape = 's32[1]{0}', space=sflag, size = 0x4, scoped, tag = 'scoped memory for tpu_custom_call.1']
    #allocation5 [shape = 'u8[32768]{0}', space=vmem, size = 0x8000, scoped, tag = 'input window, operand 2, single buffered']
    #allocation6 [shape = 's32[1]{0}', space=sflag, size = 0x4, scoped, tag = 'scoped memory for tpu_custom_call.1']
    #allocation7 [shape = 'u8[65536]{0}', space=vmem, size = 0x10000, scoped, tag = 'input window, operand 4, single buffered']
    #allocation8 [shape = 'u8[65536]{0}', space=vmem, size = 0x10000, scoped, tag = 'input window, operand 5, single buffered']
    #allocation9 [shape = 's32[1]{0}', space=sflag, size = 0x4, scoped, tag = 'scoped memory for tpu_custom_call.1']
    #allocation10 [shape = 'u8[8192]{0}', space=vmem, size = 0x2000, scoped, tag = 'output window, operand 0, single buffered']
    %12 = vsyncpa [#allocation3], 0
    %13 = vsyncpa [#allocation6], 0
    %14 = vsyncpa [#allocation9], 0
    %15 = vsyncpa [#allocation4], 0
    // Predicated region
    $region2: #{tpu_custom_call.1} parent=1 // pred_check
      _
    $region3: #{tpu_custom_call.1} parent=1 // pred_check_branch
      %17 = sbr.rel (0) target = $region5
    $region4: #{tpu_custom_call.1} parent=1 // pred_region
      %s19 = ssub.s32 128, 128
      %20 = vsyncadd [#allocation3], %s19
      %s22 = sshll.u32 [#allocation2], 4
      %s23 = int_to_ptr.vmem [resolvable:$true] %s22
      %25 = dma.hbm_to_vmem [thread:$0]  %s0, 128, %s23, [#allocation3]
    $region5: #{tpu_custom_call.1} parent=1 // pred_fallthru
      _
    // Predicated region
    $region6: #{tpu_custom_call.1} parent=1 // pred_check
      _
    $region7: #{tpu_custom_call.1} parent=1 // pred_check_branch
      %27 = sbr.rel (0) target = $region9
    $region8: #{tpu_custom_call.1} parent=1 // pred_region
      _
    $region9: #{tpu_custom_call.1} parent=1 // pred_fallthru
      _
    // Predicated region
    $region10: #{tpu_custom_call.1} parent=1 // pred_check
      _
    $region11: #{tpu_custom_call.1} parent=1 // pred_check_branch
      %29 = sbr.rel (0) target = $region13
    $region12: #{tpu_custom_call.1} parent=1 // pred_region
      %s31 = ssub.s32 1024, 1024
      %32 = vsyncadd [#allocation6], %s31
      %s33 = sshll.u32 [#allocation5], 4
      %s34 = int_to_ptr.vmem [resolvable:$true] %s33
      %39 = dma.hbm_to_vmem [thread:$0]  %s2, 1024, %s34, [#allocation6], 128, 128, 8
    $region13: #{tpu_custom_call.1} parent=1 // pred_fallthru
      _
    // Predicated region
    $region14: #{tpu_custom_call.1} parent=1 // pred_check
      _
    $region15: #{tpu_custom_call.1} parent=1 // pred_check_branch
      %41 = sbr.rel (0) target = $region17
    $region16: #{tpu_custom_call.1} parent=1 // pred_region
      _
    $region17: #{tpu_custom_call.1} parent=1 // pred_fallthru
      _
    // Predicated region
    $region18: #{tpu_custom_call.1} parent=1 // pred_check
      _
    $region19: #{tpu_custom_call.1} parent=1 // pred_check_branch
      %43 = sbr.rel (0) target = $region21
    $region20: #{tpu_custom_call.1} parent=1 // pred_region
      %s45 = ssub.s32 2048, 2048
      %46 = vsyncadd [#allocation6], %s45
      %s47 = sshll.u32 [#allocation7], 4
      %s48 = int_to_ptr.vmem [resolvable:$true] %s47
      %53 = dma.hbm_to_vmem [thread:$0]  %s4, 2048, %s48, [#allocation6], 128, 128, 8
    $region21: #{tpu_custom_call.1} parent=1 // pred_fallthru
      _
    // Predicated region
    $region22: #{tpu_custom_call.1} parent=1 // pred_check
      _
    $region23: #{tpu_custom_call.1} parent=1 // pred_check_branch
      %55 = sbr.rel (0) target = $region25
    $region24: #{tpu_custom_call.1} parent=1 // pred_region
      %s57 = ssub.s32 2048, 2048
      %58 = vsyncadd [#allocation9], %s57
      %s59 = sshll.u32 [#allocation8], 4
      %s60 = int_to_ptr.vmem [resolvable:$true] %s59
      %65 = dma.hbm_to_vmem [thread:$0]  %s5, 2048, %s60, [#allocation9], 128, 128, 8
    $region25: #{tpu_custom_call.1} parent=1 // pred_fallthru
      _
    // Predicated region
    $region26: #{tpu_custom_call.1} parent=1 // pred_check
      _
    $region27: #{tpu_custom_call.1} parent=1 // pred_check_branch
      %67 = sbr.rel (0) target = $region29
    $region28: #{tpu_custom_call.1} parent=1 // pred_region
      _
    $region29: #{tpu_custom_call.1} parent=1 // pred_fallthru
      _
    // Predicated region
    $region30: #{tpu_custom_call.1} parent=1 // pred_check
      _
    $region31: #{tpu_custom_call.1} parent=1 // pred_check_branch
      %69 = sbr.rel (0) target = $region33
    $region32: #{tpu_custom_call.1} parent=1 // pred_region
      %70 = dma.done [#allocation3], 128
    $region33: #{tpu_custom_call.1} parent=1 // pred_fallthru
      _
    // Predicated region
    $region34: #{tpu_custom_call.1} parent=1 // pred_check
      _
    $region35: #{tpu_custom_call.1} parent=1 // pred_check_branch
      %72 = sbr.rel (0) target = $region37
    $region36: #{tpu_custom_call.1} parent=1 // pred_region
      %73 = dma.done [#allocation6], 1024
    $region37: #{tpu_custom_call.1} parent=1 // pred_fallthru
      _
    // Predicated region
    $region38: #{tpu_custom_call.1} parent=1 // pred_check
      _
    $region39: #{tpu_custom_call.1} parent=1 // pred_check_branch
      %75 = sbr.rel (0) target = $region41
    $region40: #{tpu_custom_call.1} parent=1 // pred_region
      %76 = dma.done [#allocation6], 2048
    $region41: #{tpu_custom_call.1} parent=1 // pred_fallthru
      _
    // Predicated region
    $region42: #{tpu_custom_call.1} parent=1 // pred_check
      _
    $region43: #{tpu_custom_call.1} parent=1 // pred_check_branch
      %78 = sbr.rel (0) target = $region45
    $region44: #{tpu_custom_call.1} parent=1 // pred_region
      %79 = dma.done [#allocation9], 2048
    $region45: #{tpu_custom_call.1} parent=1 // pred_fallthru
      _
    %v80 = vld [vmem:[#allocation2] sm:$0xff]
    %v81 = vld [vmem:[%s1] sm:$0x3]
    %v82 = vld [vmem:[#allocation5] sm:$0xff]
    %v83 = vld [vmem:[#allocation5 + $0x8] sm:$0xff]
    %v84 = vld [vmem:[#allocation5 + $0x10] sm:$0xff]
    %v85 = vld [vmem:[#allocation5 + $0x18] sm:$0xff]
    %v86 = vld [vmem:[#allocation5 + $0x20] sm:$0xff]
    %v87 = vld [vmem:[#allocation5 + $0x28] sm:$0xff]
    %v88 = vld [vmem:[#allocation5 + $0x30] sm:$0xff]
    %v89 = vld [vmem:[#allocation5 + $0x38] sm:$0xff]
    %v90 = vld [vmem:[%s3] sm:$0x1]
    %v92 = vlaneseq
    %v93 = vshrl.u32 %v92, 7
    %v94 = vsub.s32 0, %v93
    %v95 = vrot.slane %v90, %v94
    %vm97 = vcmask 523264
    %v99 = vsel %vm97, %v81, 0
    %101 = vmatprep.subr.mxu0 0.0
    %102 = vmatpush1.msra.mxu0 %v82
    %103 = vmatprep.subr.mxu0 0.0
    %104 = vmatpush1.msra.mxu0 %v83
    %105 = vmatprep.subr.mxu0 0.0
    %106 = vmatpush1.msra.mxu0 %v84
    %107 = vmatprep.subr.mxu0 0.0
    %108 = vmatpush1.msra.mxu0 %v85
    %109 = vmatprep.subr.mxu0 0.0
    %110 = vmatpush1.msra.mxu0 %v86
    %111 = vmatprep.subr.mxu0 0.0
    %112 = vmatpush1.msra.mxu0 %v87
    %113 = vmatprep.subr.mxu0 0.0
    %114 = vmatpush1.msra.mxu0 %v88
    %115 = vmatprep.subr.mxu0 0.0
    %116 = vmatpush1.msra.mxu0 %v89
    %117 = vmatprep.subr.mxu0 0.0
    %118 = vmatpush1.msra.mxu0 0.0
    %119 = vmatprep.subr.mxu0 0.0
    %120 = vmatpush1.msra.mxu0 0.0
    %121 = vmatprep.subr.mxu0 0.0
    %122 = vmatpush1.msra.mxu0 0.0
    %123 = vmatprep.subr.mxu0 0.0
    %124 = vmatpush1.msra.mxu0 0.0
    %125 = vmatprep.subr.mxu0 0.0
    %126 = vmatpush1.msra.mxu0 0.0
    %127 = vmatprep.subr.mxu0 0.0
    %128 = vmatpush1.msra.mxu0 0.0
    %129 = vmatprep.subr.mxu0 0.0
    %130 = vmatpush1.msra.mxu0 0.0
    %131 = vmatprep.subr.mxu0 0.0
    %132 = vmatpush1.msra.mxu0 0.0
    %133 = vmatprep.subr.mxu0 0.0
    %134 = vmatpush1.msra.mxu0 0.0
    %135 = vmatprep.subr.mxu0 0.0
    %136 = vmatpush1.msra.mxu0 0.0
    %137 = vmatprep.subr.mxu0 0.0
    %138 = vmatpush1.msra.mxu0 0.0
    %139 = vmatprep.subr.mxu0 0.0
    %140 = vmatpush1.msra.mxu0 0.0
    %141 = vmatprep.subr.mxu0 0.0
    %142 = vmatpush1.msra.mxu0 0.0
    %143 = vmatprep.subr.mxu0 0.0
    %144 = vmatpush1.msra.mxu0 0.0
    %145 = vmatprep.subr.mxu0 0.0
    %146 = vmatpush1.msra.mxu0 0.0
    %147 = vmatprep.subr.mxu0 0.0
    %148 = vmatpush1.msra.mxu0 0.0
    %149 = vmatprep.subr.mxu0 0.0
    %150 = vmatpush1.msra.mxu0 0.0
    %151 = vmatprep.subr.mxu0 0.0
    %152 = vmatpush1.msra.mxu0 0.0
    %153 = vmatprep.subr.mxu0 0.0
    %154 = vmatpush1.msra.mxu0 0.0
    %155 = vmatprep.subr.mxu0 0.0
    %156 = vmatpush1.msra.mxu0 0.0
    %157 = vmatprep.subr.mxu0 0.0
    %158 = vmatpush1.msra.mxu0 0.0
    %159 = vmatprep.subr.mxu0 0.0
    %160 = vmatpush1.msra.mxu0 0.0
    %161 = vmatprep.subr.mxu0 0.0
    %162 = vmatpush1.msra.mxu0 0.0
    %163 = vmatprep.subr.mxu0 0.0
    %164 = vmatpush1.msra.mxu0 0.0
    %165 = vmatprep.mubr.f32.mxu0 0.0
    %166 = vmatmul.mubr.f32.gmra.mrb[0].mxu0 %v99
    %v167 = vpop.f32.mrb[0].mxu0
    %v168 = vadd.f32 %v95, %v167
    %v169 = vpop.f32.mrb[0].mxu0
    %170 = vdwg.mxu0
    %v171 = vld [vmem:[#allocation7] sm:$0xff]
    %v172 = vld [vmem:[#allocation7 + $0x8] sm:$0xff]
    %v173 = vld [vmem:[#allocation7 + $0x10] sm:$0xff]
    %v174 = vld [vmem:[#allocation7 + $0x18] sm:$0xff]
    %v175 = vld [vmem:[#allocation7 + $0x20] sm:$0xff]
    %v176 = vld [vmem:[#allocation7 + $0x28] sm:$0xff]
    %v177 = vld [vmem:[#allocation7 + $0x30] sm:$0xff]
    %v178 = vld [vmem:[#allocation7 + $0x38] sm:$0xff]
    %v179 = vld [vmem:[#allocation7 + $0x40] sm:$0xff]
    %v180 = vld [vmem:[#allocation7 + $0x48] sm:$0xff]
    %v181 = vld [vmem:[#allocation7 + $0x50] sm:$0xff]
    %v182 = vld [vmem:[#allocation7 + $0x58] sm:$0xff]
    %v183 = vld [vmem:[#allocation7 + $0x60] sm:$0xff]
    %v184 = vld [vmem:[#allocation7 + $0x68] sm:$0xff]
    %v185 = vld [vmem:[#allocation7 + $0x70] sm:$0xff]
    %v186 = vld [vmem:[#allocation7 + $0x78] sm:$0xff]
    %187 = vmatprep.subr.mxu0 0.0
    %188 = vmatpush1.msra.mxu0 %v171
    %189 = vmatprep.subr.mxu0 0.0
    %190 = vmatpush1.msra.mxu0 %v172
    %191 = vmatprep.subr.mxu0 0.0
    %192 = vmatpush1.msra.mxu0 %v173
    %193 = vmatprep.subr.mxu0 0.0
    %194 = vmatpush1.msra.mxu0 %v174
    %195 = vmatprep.subr.mxu0 0.0
    %196 = vmatpush1.msra.mxu0 %v175
    %197 = vmatprep.subr.mxu0 0.0
    %198 = vmatpush1.msra.mxu0 %v176
    %199 = vmatprep.subr.mxu0 0.0
    %200 = vmatpush1.msra.mxu0 %v177
    %201 = vmatprep.subr.mxu0 0.0
    %202 = vmatpush1.msra.mxu0 %v178
    %203 = vmatprep.subr.mxu0 0.0
    %204 = vmatpush1.msra.mxu0 %v179
    %205 = vmatprep.subr.mxu0 0.0
    %206 = vmatpush1.msra.mxu0 %v180
    %207 = vmatprep.subr.mxu0 0.0
    %208 = vmatpush1.msra.mxu0 %v181
    %209 = vmatprep.subr.mxu0 0.0
    %210 = vmatpush1.msra.mxu0 %v182
    %211 = vmatprep.subr.mxu0 0.0
    %212 = vmatpush1.msra.mxu0 %v183
    %213 = vmatprep.subr.mxu0 0.0
    %214 = vmatpush1.msra.mxu0 %v184
    %215 = vmatprep.subr.mxu0 0.0
    %216 = vmatpush1.msra.mxu0 %v185
    %217 = vmatprep.subr.mxu0 0.0
    %218 = vmatpush1.msra.mxu0 %v186
    %219 = vmatprep.subr.mxu0 0.0
    %220 = vmatpush1.msra.mxu0 0.0
    %221 = vmatprep.subr.mxu0 0.0
    %222 = vmatpush1.msra.mxu0 0.0
    %223 = vmatprep.subr.mxu0 0.0
    %224 = vmatpush1.msra.mxu0 0.0
    %225 = vmatprep.subr.mxu0 0.0
    %226 = vmatpush1.msra.mxu0 0.0
    %227 = vmatprep.subr.mxu0 0.0
    %228 = vmatpush1.msra.mxu0 0.0
    %229 = vmatprep.subr.mxu0 0.0
    %230 = vmatpush1.msra.mxu0 0.0
    %231 = vmatprep.subr.mxu0 0.0
    %232 = vmatpush1.msra.mxu0 0.0
    %233 = vmatprep.subr.mxu0 0.0
    %234 = vmatpush1.msra.mxu0 0.0
    %235 = vmatprep.subr.mxu0 0.0
    %236 = vmatpush1.msra.mxu0 0.0
    %237 = vmatprep.subr.mxu0 0.0
    %238 = vmatpush1.msra.mxu0 0.0
    %239 = vmatprep.subr.mxu0 0.0
    %240 = vmatpush1.msra.mxu0 0.0
    %241 = vmatprep.subr.mxu0 0.0
    %242 = vmatpush1.msra.mxu0 0.0
    %243 = vmatprep.subr.mxu0 0.0
    %244 = vmatpush1.msra.mxu0 0.0
    %245 = vmatprep.subr.mxu0 0.0
    %246 = vmatpush1.msra.mxu0 0.0
    %247 = vmatprep.subr.mxu0 0.0
    %248 = vmatpush1.msra.mxu0 0.0
    %249 = vmatprep.subr.mxu0 0.0
    %250 = vmatpush1.msra.mxu0 0.0
    %251 = vmatprep.mubr.f32.mxu0 0.0
    %252 = vmatmul.mubr.f32.gmra.mrb[0].mxu0 %v80
    %v253 = vpop.f32.mrb[0].mxu0
    %v254 = vadd.f32 0.0, %v253
    %v255 = vpop.f32.mrb[0].mxu0
    %256 = vdwg.mxu0
    %v257 = vadd.f32 %v80, %v254
    %v258 = vld [vmem:[%s6] sm:$0x1]
    %v260 = vlaneseq
    %v261 = vshrl.u32 %v260, 7
    %v262 = vsub.s32 0, %v261
    %v263 = vrot.slane %v258, %v262
    %v265 = vadd.f32 %v257, %v263
    %v268 = vunpack.c.l.s4 1966171168
    %v269 = vunpack.c.0.s8 %v268
    %v270 = vlaneseq
    %v271 = vshrl.u32 %v270, 7
    %v272 = vsub.s32 %v269, %v271
    %v273 = vrot.slane %v168, %v272
    %v274 = vcombine.high %v273, %v273
    %v276 = vunpack.c.l.s4 1966171168
    %v277 = vunpack.c.0.s8 %v276
    %v278 = vlaneseq
    %v279 = vshrl.u32 %v278, 7
    %v280 = vsub.s32 %v277, %v279
    %v281 = vrot.slane %v273, %v280
    %v283 = vunpack.c.l.s4 1966171168
    %v284 = vunpack.c.0.s8 %v283
    %v285 = vlaneseq
    %v286 = vshrl.u32 %v285, 7
    %v287 = vsub.s32 %v284, %v286
    %v288 = vrot.slane %v274, %v287
    %v289 = vlaneseq
    %v290 = vshrl.u32 %v289, 7
    %v291 = vsub.s32 0, %v290
    %v292 = vrot.slane %v281, %v291
    %v293 = vlaneseq
    %v294 = vshrl.u32 %v293, 7
    %v295 = vsub.s32 0, %v294
    %v296 = vrot.slane %v288, %v295
    %v299 = vmul.f32 %v292, %v80
    %v300 = vmul.f32 %v296, %v80
    %v301 = vld [vmem:[#allocation8] sm:$0xff]
    %v302 = vld [vmem:[#allocation8 + $0x8] sm:$0xff]
    %v303 = vld [vmem:[#allocation8 + $0x10] sm:$0xff]
    %v304 = vld [vmem:[#allocation8 + $0x18] sm:$0xff]
    %v305 = vld [vmem:[#allocation8 + $0x20] sm:$0xff]
    %v306 = vld [vmem:[#allocation8 + $0x28] sm:$0xff]
    %v307 = vld [vmem:[#allocation8 + $0x30] sm:$0xff]
    %v308 = vld [vmem:[#allocation8 + $0x38] sm:$0xff]
    %v309 = vld [vmem:[#allocation8 + $0x40] sm:$0xff]
    %v310 = vld [vmem:[#allocation8 + $0x48] sm:$0xff]
    %v311 = vld [vmem:[#allocation8 + $0x50] sm:$0xff]
    %v312 = vld [vmem:[#allocation8 + $0x58] sm:$0xff]
    %v313 = vld [vmem:[#allocation8 + $0x60] sm:$0xff]
    %v314 = vld [vmem:[#allocation8 + $0x68] sm:$0xff]
    %v315 = vld [vmem:[#allocation8 + $0x70] sm:$0xff]
    %v316 = vld [vmem:[#allocation8 + $0x78] sm:$0xff]
    %317 = vmatprep.subr.mxu0 0.0
    %318 = vmatpush1.msra.mxu0 %v301
    %319 = vmatprep.subr.mxu0 0.0
    %320 = vmatpush1.msra.mxu0 %v302
    %321 = vmatprep.subr.mxu0 0.0
    %322 = vmatpush1.msra.mxu0 %v303
    %323 = vmatprep.subr.mxu0 0.0
    %324 = vmatpush1.msra.mxu0 %v304
    %325 = vmatprep.subr.mxu0 0.0
    %326 = vmatpush1.msra.mxu0 %v305
    %327 = vmatprep.subr.mxu0 0.0
    %328 = vmatpush1.msra.mxu0 %v306
    %329 = vmatprep.subr.mxu0 0.0
    %330 = vmatpush1.msra.mxu0 %v307
    %331 = vmatprep.subr.mxu0 0.0
    %332 = vmatpush1.msra.mxu0 %v308
    %333 = vmatprep.subr.mxu0 0.0
    %334 = vmatpush1.msra.mxu0 %v309
    %335 = vmatprep.subr.mxu0 0.0
    %336 = vmatpush1.msra.mxu0 %v310
    %337 = vmatprep.subr.mxu0 0.0
    %338 = vmatpush1.msra.mxu0 %v311
    %339 = vmatprep.subr.mxu0 0.0
    %340 = vmatpush1.msra.mxu0 %v312
    %341 = vmatprep.subr.mxu0 0.0
    %342 = vmatpush1.msra.mxu0 %v313
    %343 = vmatprep.subr.mxu0 0.0
    %344 = vmatpush1.msra.mxu0 %v314
    %345 = vmatprep.subr.mxu0 0.0
    %346 = vmatpush1.msra.mxu0 %v315
    %347 = vmatprep.subr.mxu0 0.0
    %348 = vmatpush1.msra.mxu0 %v316
    %349 = vmatprep.subr.mxu0 0.0
    %350 = vmatpush1.msra.mxu0 0.0
    %351 = vmatprep.subr.mxu0 0.0
    %352 = vmatpush1.msra.mxu0 0.0
    %353 = vmatprep.subr.mxu0 0.0
    %354 = vmatpush1.msra.mxu0 0.0
    %355 = vmatprep.subr.mxu0 0.0
    %356 = vmatpush1.msra.mxu0 0.0
    %357 = vmatprep.subr.mxu0 0.0
    %358 = vmatpush1.msra.mxu0 0.0
    %359 = vmatprep.subr.mxu0 0.0
    %360 = vmatpush1.msra.mxu0 0.0
    %361 = vmatprep.subr.mxu0 0.0
    %362 = vmatpush1.msra.mxu0 0.0
    %363 = vmatprep.subr.mxu0 0.0
    %364 = vmatpush1.msra.mxu0 0.0
    %365 = vmatprep.subr.mxu0 0.0
    %366 = vmatpush1.msra.mxu0 0.0
    %367 = vmatprep.subr.mxu0 0.0
    %368 = vmatpush1.msra.mxu0 0.0
    %369 = vmatprep.subr.mxu0 0.0
    %370 = vmatpush1.msra.mxu0 0.0
    %371 = vmatprep.subr.mxu0 0.0
    %372 = vmatpush1.msra.mxu0 0.0
    %373 = vmatprep.subr.mxu0 0.0
    %374 = vmatpush1.msra.mxu0 0.0
    %375 = vmatprep.subr.mxu0 0.0
    %376 = vmatpush1.msra.mxu0 0.0
    %377 = vmatprep.subr.mxu0 0.0
    %378 = vmatpush1.msra.mxu0 0.0
    %379 = vmatprep.subr.mxu0 0.0
    %380 = vmatpush1.msra.mxu0 0.0
    %381 = vmatprep.mubr.f32.mxu0 0.0
    %382 = vmatmul.mubr.f32.gmra.mrb[0].mxu0 %v299
    %v383 = vpop.f32.mrb[0].mxu0
    %v384 = vadd.f32 0.0, %v383
    %v385 = vpop.f32.mrb[0].mxu0
    %386 = vmatprep.mubr.f32.mxu0 0.0
    %387 = vmatmul.mubr.f32.gmra.mrb[0].mxu0 %v300
    %v388 = vpop.f32.mrb[0].mxu0
    %v389 = vadd.f32 0.0, %v388
    %v390 = vpop.f32.mrb[0].mxu0
    %391 = vdwg.mxu0
    %v392 = vadd.f32 %v265, %v384
    %v393 = vadd.f32 %v265, %v389
    %394 = vst [vmem:[#allocation10] sm:$0xff] %v392
    %395 = vst [vmem:[#allocation10 + $0x8] sm:$0xff] %v393
    // Predicated region
    $region46: #{tpu_custom_call.1} parent=1 // pred_check
      _
    $region47: #{tpu_custom_call.1} parent=1 // pred_check_branch
      %397 = sbr.rel (0) target = $region49
    $region48: #{tpu_custom_call.1} parent=1 // pred_region
      %s399 = ssub.s32 256, 256
      %400 = vsyncadd [#allocation4], %s399
      %s401 = sshll.u32 [#allocation10], 4
      %s402 = int_to_ptr.vmem [resolvable:$true] %s401
      %407 = dma.vmem_to_hbm [thread:$0]  %s402, 256, %s7, [#allocation4], 128, 128, 8
    $region49: #{tpu_custom_call.1} parent=1 // pred_fallthru
      _
    // Predicated region
    $region50: #{tpu_custom_call.1} parent=1 // pred_check
      _
    $region51: #{tpu_custom_call.1} parent=1 // pred_check_branch
      %409 = sbr.rel (0) target = $region53
    $region52: #{tpu_custom_call.1} parent=1 // pred_region
      %410 = dma.done [#allocation4], 256
    $region53: #{tpu_custom_call.1} parent=1 // pred_fallthru
      _
    %411 = vsyncpa [#allocation3], 1
    %412 = vsyncpa [#allocation6], 1
    %413 = vsyncpa [#allocation9], 1
    %414 = vsyncpa [#allocation4], 1

</llo_original>
